<compile_context>
chip_gen: v7x
topology: tpu7x:2x2x1
jax: 0.10.0
libtpu: 0.0.40
codegen_flags: <defaults>
</compile_context>

<pallas_src>
import jax
import jax.numpy as jnp
from jax.experimental import pallas as pl
from jax.experimental.pallas import tpu as pltpu


def _round_up(n, m):
    return ((n + m - 1) // m) * m


def _elu(x):
    # ELU with alpha=1.0 (matches nn.ELU() defaults).
    # min(x, 0) guards exp overflow in the unselected branch.
    # TODO(synk): use jnp.expm1 for last-ULP parity with PyTorch if/when it lowers in Mosaic.
    return jnp.where(x > 0, x, jnp.exp(jnp.minimum(x, 0.0)) - 1.0)


def _layer_norm(x, gamma, beta, eps=1e-5):
    # Single-pass LayerNorm: sum and sum-of-squares in one traversal,
    # var = E[x^2] - E[x]^2  (fewer XLU reductions / VPU passes).
    inv_n = 1.0 / x.shape[-1]
    s = jnp.sum(x, axis=-1, keepdims=True)
    s2 = jnp.sum(x * x, axis=-1, keepdims=True)
    mu = s * inv_n
    var = s2 * inv_n - mu * mu
    return (x - mu) * jax.lax.rsqrt(var + eps) * gamma + beta


def value_fn_kernel(x_ref,
                    w1_ref, b1_ref, g1_ref, be1_ref,
                    w2_ref, b2_ref, g2_ref, be2_ref,
                    w3r_ref, b3_ref,
                    o_ref):
    x = x_ref[...]                                                    # [TB, D_in]

    # Layer 1: Linear -> ELU -> LayerNorm
    h = jnp.dot(x, w1_ref[...], preferred_element_type=jnp.float32) + b1_ref[...]
    h = _layer_norm(_elu(h), g1_ref[...], be1_ref[...])

    # Layer 2: Linear -> ELU -> LayerNorm
    h = jnp.dot(h, w2_ref[...], preferred_element_type=jnp.float32) + b2_ref[...]
    h = _layer_norm(_elu(h), g2_ref[...], be2_ref[...])

    # Output head (H2 -> 1): VPU multiply + lane reduce instead of an N=1 MXU matmul.
    o_ref[...] = jnp.sum(h * w3r_ref[...], axis=-1, keepdims=True) + b3_ref[...]


def value_function_forward(x, params, a=None, *, block_b=2048):
    """Forward pass of ValueFunction.

    Args:
        x: state, [batch, obs_dim] float32
        params: dict of weights (see init_params)
        a: optional action, [batch, action_dim] float32
        block_b: batch tile size (rounded down to actual batch if smaller)
    Returns:
        value: [batch, 1] float32
    """
    if a is not None:
        x = jnp.concatenate([x, a], axis=1)          # glue concat stays in JAX
    x = x.astype(jnp.float32)
    B, D_in = x.shape
    H1 = params["w1"].shape[1]
    H2 = params["w2"].shape[1]

    # Batch tile: multiple of 8 sublanes; pad the batch to a multiple of the tile.
    tb = min(block_b, _round_up(B, 8))
    Bp = _round_up(B, tb)
    if Bp != B:
        x = jnp.pad(x, ((0, Bp - B), (0, 0)))

    # Weights/biases: constant index_map -> stay VMEM-resident across all grid steps.
    const = lambda shape: pl.BlockSpec(shape, lambda i: (0, 0))

    # Output-head weight passed as a (1, H2) row for the VPU reduce.
    w3_row = params["w3"].reshape(1, H2)

    out = pl.pallas_call(
        value_fn_kernel,
        out_shape=jax.ShapeDtypeStruct((Bp, 1), jnp.float32),
        grid=(Bp // tb,),
        in_specs=[
            pl.BlockSpec((tb, D_in), lambda i: (i, 0)),
            const((D_in, H1)), const((1, H1)), const((1, H1)), const((1, H1)),
            const((H1, H2)), const((1, H2)), const((1, H2)), const((1, H2)),
            const((1, H2)), const((1, 1)),
        ],
        out_specs=pl.BlockSpec((tb, 1), lambda i: (i, 0)),
        compiler_params=pltpu.CompilerParams(
            dimension_semantics=("parallel",),        # megacore-shards batch on v7x
            vmem_limit_bytes=32 * 1024 * 1024),
    )(x,
      params["w1"], params["b1"], params["g1"], params["be1"],
      params["w2"], params["b2"], params["g2"], params["be2"],
      w3_row, params["b3"])
    return out[:B]


def init_params(key, input_dim, net_arch=(64, 64)):
    """Deterministic init mimicking nn.Linear default (uniform +/- 1/sqrt(fan_in))
    and nn.LayerNorm default (gamma=1, beta=0)."""
    dims = [input_dim] + list(net_arch)
    params = {}
    keys = jax.random.split(key, 2 * len(dims))
    ki = 0

    def linear(kw, kb, fan_in, fan_out):
        bound = 1.0 / (fan_in ** 0.5)
        w = jax.random.uniform(kw, (fan_in, fan_out), jnp.float32, -bound, bound)
        b = jax.random.uniform(kb, (1, fan_out), jnp.float32, -bound, bound)
        return w, b

    params["w1"], params["b1"] = linear(keys[ki], keys[ki + 1], dims[0], dims[1]); ki += 2
    params["g1"] = jnp.ones((1, dims[1]), jnp.float32)
    params["be1"] = jnp.zeros((1, dims[1]), jnp.float32)

    params["w2"], params["b2"] = linear(keys[ki], keys[ki + 1], dims[1], dims[2]); ki += 2
    params["g2"] = jnp.ones((1, dims[2]), jnp.float32)
    params["be2"] = jnp.zeros((1, dims[2]), jnp.float32)

    params["w3"], params["b3"] = linear(keys[ki], keys[ki + 1], dims[2], 1); ki += 2
    return params


def _reference_forward(x, params, a=None):
    """Pure-JAX reference for correctness check."""
    if a is not None:
        x = jnp.concatenate([x, a], axis=1)

    def ln(h, g, b, eps=1e-5):
        mu = jnp.mean(h, axis=-1, keepdims=True)
        var = jnp.mean((h - mu) ** 2, axis=-1, keepdims=True)
        return (h - mu) * jax.lax.rsqrt(var + eps) * g + b

    def elu(h):
        return jnp.where(h > 0, h, jnp.exp(jnp.minimum(h, 0.0)) - 1.0)

    h = x @ params["w1"] + params["b1"]
    h = ln(elu(h), params["g1"], params["be1"])
    h = h @ params["w2"] + params["b2"]
    h = ln(elu(h), params["g2"], params["be2"])
    return h @ params["w3"] + params["b3"]


if __name__ == "__main__":
    key = jax.random.PRNGKey(0)
    k_x, k_a, k_p = jax.random.split(key, 3)

    batch = 8
    obs_dim = 24
    action_dim = 8
    input_dim = obs_dim + action_dim   # critic sees [state, action]

    x = jax.random.normal(k_x, (batch, obs_dim), jnp.float32)
    a = jax.random.normal(k_a, (batch, action_dim), jnp.float32)
    params = init_params(k_p, input_dim, net_arch=[64, 64])

    # Small, tile-aligned batch.
    value = value_function_forward(x, params, a)
    value = jax.block_until_ready(value)
    ref = _reference_forward(x, params, a)
    assert value.shape == (batch, 1)
    assert jnp.allclose(value, ref, atol=1e-4, rtol=1e-4), (value, ref)

    # Non-multiple-of-8 batch exercises the padding path (partial last block).
    batch2 = 13
    x2 = jax.random.normal(jax.random.PRNGKey(1), (batch2, obs_dim), jnp.float32)
    a2 = jax.random.normal(jax.random.PRNGKey(2), (batch2, action_dim), jnp.float32)
    value2 = jax.block_until_ready(value_function_forward(x2, params, a2))
    ref2 = _reference_forward(x2, params, a2)
    assert value2.shape == (batch2, 1)
    assert jnp.allclose(value2, ref2, atol=1e-4, rtol=1e-4), (value2, ref2)

    print("KERNEL_OK")
</pallas_src>

<mosaic_0001>
module attributes {stable_mosaic.version = 11 : i64} {
  func.func @value_fn_kernel(%arg0: i32, %arg1: memref<8x32xf32, #tpu.memory_space<vmem>>, %arg2: memref<32x64xf32, #tpu.memory_space<vmem>>, %arg3: memref<1x64xf32, #tpu.memory_space<vmem>>, %arg4: memref<1x64xf32, #tpu.memory_space<vmem>>, %arg5: memref<1x64xf32, #tpu.memory_space<vmem>>, %arg6: memref<64x64xf32, #tpu.memory_space<vmem>>, %arg7: memref<1x64xf32, #tpu.memory_space<vmem>>, %arg8: memref<1x64xf32, #tpu.memory_space<vmem>>, %arg9: memref<1x64xf32, #tpu.memory_space<vmem>>, %arg10: memref<1x64xf32, #tpu.memory_space<vmem>>, %arg11: memref<1x1xf32, #tpu.memory_space<vmem>>, %arg12: memref<8x1xf32, #tpu.memory_space<vmem>>) attributes {dimension_semantics = [#tpu.dimension_semantics<parallel>], iteration_bounds = array<i64: 1>, scalar_prefetch = 0 : i64, scratch_operands = 0 : i64, tpu.core_type = #tpu.core_type<tc>, window_params = [{transform_indices = @transform_0, window_bounds = array<i64: 8, 32>}, {pipeline_mode = #tpu.pipeline_mode<synchronous>, transform_indices = @transform_1, window_bounds = array<i64: 32, 64>}, {pipeline_mode = #tpu.pipeline_mode<synchronous>, transform_indices = @transform_2, window_bounds = array<i64: 1, 64>}, {pipeline_mode = #tpu.pipeline_mode<synchronous>, transform_indices = @transform_3, window_bounds = array<i64: 1, 64>}, {pipeline_mode = #tpu.pipeline_mode<synchronous>, transform_indices = @transform_4, window_bounds = array<i64: 1, 64>}, {pipeline_mode = #tpu.pipeline_mode<synchronous>, transform_indices = @transform_5, window_bounds = array<i64: 64, 64>}, {pipeline_mode = #tpu.pipeline_mode<synchronous>, transform_indices = @transform_6, window_bounds = array<i64: 1, 64>}, {pipeline_mode = #tpu.pipeline_mode<synchronous>, transform_indices = @transform_7, window_bounds = array<i64: 1, 64>}, {pipeline_mode = #tpu.pipeline_mode<synchronous>, transform_indices = @transform_8, window_bounds = array<i64: 1, 64>}, {pipeline_mode = #tpu.pipeline_mode<synchronous>, transform_indices = @transform_9, window_bounds = array<i64: 1, 64>}, {pipeline_mode = #tpu.pipeline_mode<synchronous>, transform_indices = @transform_10, window_bounds = array<i64: 1, 1>}, {transform_indices = @transform_11, window_bounds = array<i64: 8, 1>}]} {
    %c0 = arith.constant 0 : index
    %c0_0 = arith.constant 0 : index
    %0 = vector.load %arg1[%c0, %c0_0] : memref<8x32xf32, #tpu.memory_space<vmem>>, vector<8x32xf32>
    %c0_1 = arith.constant 0 : index
    %c0_2 = arith.constant 0 : index
    %1 = vector.load %arg2[%c0_1, %c0_2] : memref<32x64xf32, #tpu.memory_space<vmem>>, vector<32x64xf32>
    %cst = arith.constant dense<0.000000e+00> : vector<8x64xf32>
    %2 = tpu.matmul %0, %1, %cst {dimension_numbers = #tpu.dot_dimension_numbers<[1], [0], [0], [1], [0, 0, 1, 1], [], []>} : vector<8x32xf32>, vector<32x64xf32>, vector<8x64xf32> -> vector<8x64xf32>
    %c0_3 = arith.constant 0 : index
    %c0_4 = arith.constant 0 : index
    %3 = vector.load %arg3[%c0_3, %c0_4] : memref<1x64xf32, #tpu.memory_space<vmem>>, vector<1x64xf32>
    %4 = vector.broadcast %3 : vector<1x64xf32> to vector<8x64xf32>
    %5 = arith.addf %2, %4 : vector<8x64xf32>
    %cst_5 = arith.constant 0.000000e+00 : f32
    %6 = vector.broadcast %cst_5 : f32 to vector<8x64xf32>
    %7 = arith.cmpf ogt, %5, %6 : vector<8x64xf32>
    %cst_6 = arith.constant 0.000000e+00 : f32
    %8 = vector.broadcast %cst_6 : f32 to vector<8x64xf32>
    %9 = arith.minimumf %5, %8 : vector<8x64xf32>
    %10 = math.exp %9 : vector<8x64xf32>
    %cst_7 = arith.constant 1.000000e+00 : f32
    %11 = vector.broadcast %cst_7 : f32 to vector<8x64xf32>
    %12 = arith.subf %10, %11 : vector<8x64xf32>
    %13 = arith.select %7, %5, %12 : vector<8x64xi1>, vector<8x64xf32>
    %c0_8 = arith.constant 0 : index
    %c0_9 = arith.constant 0 : index
    %14 = vector.load %arg4[%c0_8, %c0_9] : memref<1x64xf32, #tpu.memory_space<vmem>>, vector<1x64xf32>
    %c0_10 = arith.constant 0 : index
    %c0_11 = arith.constant 0 : index
    %15 = vector.load %arg5[%c0_10, %c0_11] : memref<1x64xf32, #tpu.memory_space<vmem>>, vector<1x64xf32>
    %cst_12 = arith.constant dense<0.000000e+00> : vector<8xf32>
    %16 = vector.multi_reduction <add>, %13, %cst_12 [1] : vector<8x64xf32> to vector<8xf32>
    %17 = vector.shape_cast %16 : vector<8xf32> to vector<8x1xf32>
    %18 = arith.mulf %13, %13 : vector<8x64xf32>
    %cst_13 = arith.constant dense<0.000000e+00> : vector<8xf32>
    %19 = vector.multi_reduction <add>, %18, %cst_13 [1] : vector<8x64xf32> to vector<8xf32>
    %20 = vector.shape_cast %19 : vector<8xf32> to vector<8x1xf32>
    %cst_14 = arith.constant 1.562500e-02 : f32
    %21 = vector.broadcast %cst_14 : f32 to vector<8x1xf32>
    %22 = arith.mulf %17, %21 : vector<8x1xf32>
    %cst_15 = arith.constant 1.562500e-02 : f32
    %23 = vector.broadcast %cst_15 : f32 to vector<8x1xf32>
    %24 = arith.mulf %20, %23 : vector<8x1xf32>
    %25 = arith.mulf %22, %22 : vector<8x1xf32>
    %26 = arith.subf %24, %25 : vector<8x1xf32>
    %27 = vector.broadcast %22 : vector<8x1xf32> to vector<8x64xf32>
    %28 = arith.subf %13, %27 : vector<8x64xf32>
    %cst_16 = arith.constant 9.99999974E-6 : f32
    %29 = vector.broadcast %cst_16 : f32 to vector<8x1xf32>
    %30 = arith.addf %26, %29 : vector<8x1xf32>
    %31 = math.rsqrt %30 : vector<8x1xf32>
    %32 = vector.broadcast %31 : vector<8x1xf32> to vector<8x64xf32>
    %33 = arith.mulf %28, %32 : vector<8x64xf32>
    %34 = vector.broadcast %14 : vector<1x64xf32> to vector<8x64xf32>
    %35 = arith.mulf %33, %34 : vector<8x64xf32>
    %36 = vector.broadcast %15 : vector<1x64xf32> to vector<8x64xf32>
    %37 = arith.addf %35, %36 : vector<8x64xf32>
    %c0_17 = arith.constant 0 : index
    %c0_18 = arith.constant 0 : index
    %38 = vector.load %arg6[%c0_17, %c0_18] : memref<64x64xf32, #tpu.memory_space<vmem>>, vector<64x64xf32>
    %cst_19 = arith.constant dense<0.000000e+00> : vector<8x64xf32>
    %39 = tpu.matmul %37, %38, %cst_19 {dimension_numbers = #tpu.dot_dimension_numbers<[1], [0], [0], [1], [0, 0, 1, 1], [], []>} : vector<8x64xf32>, vector<64x64xf32>, vector<8x64xf32> -> vector<8x64xf32>
    %c0_20 = arith.constant 0 : index
    %c0_21 = arith.constant 0 : index
    %40 = vector.load %arg7[%c0_20, %c0_21] : memref<1x64xf32, #tpu.memory_space<vmem>>, vector<1x64xf32>
    %41 = vector.broadcast %40 : vector<1x64xf32> to vector<8x64xf32>
    %42 = arith.addf %39, %41 : vector<8x64xf32>
    %cst_22 = arith.constant 0.000000e+00 : f32
    %43 = vector.broadcast %cst_22 : f32 to vector<8x64xf32>
    %44 = arith.cmpf ogt, %42, %43 : vector<8x64xf32>
    %cst_23 = arith.constant 0.000000e+00 : f32
    %45 = vector.broadcast %cst_23 : f32 to vector<8x64xf32>
    %46 = arith.minimumf %42, %45 : vector<8x64xf32>
    %47 = math.exp %46 : vector<8x64xf32>
    %cst_24 = arith.constant 1.000000e+00 : f32
    %48 = vector.broadcast %cst_24 : f32 to vector<8x64xf32>
    %49 = arith.subf %47, %48 : vector<8x64xf32>
    %50 = arith.select %44, %42, %49 : vector<8x64xi1>, vector<8x64xf32>
    %c0_25 = arith.constant 0 : index
    %c0_26 = arith.constant 0 : index
    %51 = vector.load %arg8[%c0_25, %c0_26] : memref<1x64xf32, #tpu.memory_space<vmem>>, vector<1x64xf32>
    %c0_27 = arith.constant 0 : index
    %c0_28 = arith.constant 0 : index
    %52 = vector.load %arg9[%c0_27, %c0_28] : memref<1x64xf32, #tpu.memory_space<vmem>>, vector<1x64xf32>
    %cst_29 = arith.constant dense<0.000000e+00> : vector<8xf32>
    %53 = vector.multi_reduction <add>, %50, %cst_29 [1] : vector<8x64xf32> to vector<8xf32>
    %54 = vector.shape_cast %53 : vector<8xf32> to vector<8x1xf32>
    %55 = arith.mulf %50, %50 : vector<8x64xf32>
    %cst_30 = arith.constant dense<0.000000e+00> : vector<8xf32>
    %56 = vector.multi_reduction <add>, %55, %cst_30 [1] : vector<8x64xf32> to vector<8xf32>
    %57 = vector.shape_cast %56 : vector<8xf32> to vector<8x1xf32>
    %cst_31 = arith.constant 1.562500e-02 : f32
    %58 = vector.broadcast %cst_31 : f32 to vector<8x1xf32>
    %59 = arith.mulf %54, %58 : vector<8x1xf32>
    %cst_32 = arith.constant 1.562500e-02 : f32
    %60 = vector.broadcast %cst_32 : f32 to vector<8x1xf32>
    %61 = arith.mulf %57, %60 : vector<8x1xf32>
    %62 = arith.mulf %59, %59 : vector<8x1xf32>
    %63 = arith.subf %61, %62 : vector<8x1xf32>
    %64 = vector.broadcast %59 : vector<8x1xf32> to vector<8x64xf32>
    %65 = arith.subf %50, %64 : vector<8x64xf32>
    %cst_33 = arith.constant 9.99999974E-6 : f32
    %66 = vector.broadcast %cst_33 : f32 to vector<8x1xf32>
    %67 = arith.addf %63, %66 : vector<8x1xf32>
    %68 = math.rsqrt %67 : vector<8x1xf32>
    %69 = vector.broadcast %68 : vector<8x1xf32> to vector<8x64xf32>
    %70 = arith.mulf %65, %69 : vector<8x64xf32>
    %71 = vector.broadcast %51 : vector<1x64xf32> to vector<8x64xf32>
    %72 = arith.mulf %70, %71 : vector<8x64xf32>
    %73 = vector.broadcast %52 : vector<1x64xf32> to vector<8x64xf32>
    %74 = arith.addf %72, %73 : vector<8x64xf32>
    %c0_34 = arith.constant 0 : index
    %c0_35 = arith.constant 0 : index
    %75 = vector.load %arg10[%c0_34, %c0_35] : memref<1x64xf32, #tpu.memory_space<vmem>>, vector<1x64xf32>
    %76 = vector.broadcast %75 : vector<1x64xf32> to vector<8x64xf32>
    %77 = arith.mulf %74, %76 : vector<8x64xf32>
    %cst_36 = arith.constant dense<0.000000e+00> : vector<8xf32>
    %78 = vector.multi_reduction <add>, %77, %cst_36 [1] : vector<8x64xf32> to vector<8xf32>
    %79 = vector.shape_cast %78 : vector<8xf32> to vector<8x1xf32>
    %c0_37 = arith.constant 0 : index
    %c0_38 = arith.constant 0 : index
    %80 = vector.load %arg11[%c0_37, %c0_38] : memref<1x1xf32, #tpu.memory_space<vmem>>, vector<1x1xf32>
    %81 = vector.broadcast %80 : vector<1x1xf32> to vector<8x1xf32>
    %82 = arith.addf %79, %81 : vector<8x1xf32>
    %c0_39 = arith.constant 0 : index
    %c0_40 = arith.constant 0 : index
    %83 = vector.load %arg12[%c0_39, %c0_40] : memref<8x1xf32, #tpu.memory_space<vmem>>, vector<8x1xf32>
    tpu.vector_store %arg12[%c0_39, %c0_40], %82 {strides = array<i32>} : memref<8x1xf32, #tpu.memory_space<vmem>>, vector<8x1xf32>,
    return
  }
  func.func @transform_0(%arg0: i32) -> (i32, i32) {
    %c0_i32 = arith.constant 0 : i32
    %c0_i32_0 = arith.constant 0 : i32
    return %arg0, %c0_i32 : i32, i32
  }
  func.func @transform_1(%arg0: i32) -> (i32, i32) {
    %c0_i32 = arith.constant 0 : i32
    %c0_i32_0 = arith.constant 0 : i32
    %c0_i32_1 = arith.constant 0 : i32
    return %c0_i32, %c0_i32_0 : i32, i32
  }
  func.func @transform_2(%arg0: i32) -> (i32, i32) {
    %c0_i32 = arith.constant 0 : i32
    %c0_i32_0 = arith.constant 0 : i32
    %c0_i32_1 = arith.constant 0 : i32
    return %c0_i32, %c0_i32_0 : i32, i32
  }
  func.func @transform_3(%arg0: i32) -> (i32, i32) {
    %c0_i32 = arith.constant 0 : i32
    %c0_i32_0 = arith.constant 0 : i32
    %c0_i32_1 = arith.constant 0 : i32
    return %c0_i32, %c0_i32_0 : i32, i32
  }
  func.func @transform_4(%arg0: i32) -> (i32, i32) {
    %c0_i32 = arith.constant 0 : i32
    %c0_i32_0 = arith.constant 0 : i32
    %c0_i32_1 = arith.constant 0 : i32
    return %c0_i32, %c0_i32_0 : i32, i32
  }
  func.func @transform_5(%arg0: i32) -> (i32, i32) {
    %c0_i32 = arith.constant 0 : i32
    %c0_i32_0 = arith.constant 0 : i32
    %c0_i32_1 = arith.constant 0 : i32
    return %c0_i32, %c0_i32_0 : i32, i32
  }
  func.func @transform_6(%arg0: i32) -> (i32, i32) {
    %c0_i32 = arith.constant 0 : i32
    %c0_i32_0 = arith.constant 0 : i32
    %c0_i32_1 = arith.constant 0 : i32
    return %c0_i32, %c0_i32_0 : i32, i32
  }
  func.func @transform_7(%arg0: i32) -> (i32, i32) {
    %c0_i32 = arith.constant 0 : i32
    %c0_i32_0 = arith.constant 0 : i32
    %c0_i32_1 = arith.constant 0 : i32
    return %c0_i32, %c0_i32_0 : i32, i32
  }
  func.func @transform_8(%arg0: i32) -> (i32, i32) {
    %c0_i32 = arith.constant 0 : i32
    %c0_i32_0 = arith.constant 0 : i32
    %c0_i32_1 = arith.constant 0 : i32
    return %c0_i32, %c0_i32_0 : i32, i32
  }
  func.func @transform_9(%arg0: i32) -> (i32, i32) {
    %c0_i32 = arith.constant 0 : i32
    %c0_i32_0 = arith.constant 0 : i32
    %c0_i32_1 = arith.constant 0 : i32
    return %c0_i32, %c0_i32_0 : i32, i32
  }
  func.func @transform_10(%arg0: i32) -> (i32, i32) {
    %c0_i32 = arith.constant 0 : i32
    %c0_i32_0 = arith.constant 0 : i32
    %c0_i32_1 = arith.constant 0 : i32
    return %c0_i32, %c0_i32_0 : i32, i32
  }
  func.func @transform_11(%arg0: i32) -> (i32, i32) {
    %c0_i32 = arith.constant 0 : i32
    %c0_i32_0 = arith.constant 0 : i32
    return %arg0, %c0_i32 : i32, i32
  }
}

</mosaic_0001>

<llo_original>
// kernel: tpu_custom_call.1
$region0: #{tpu_custom_call.1}
  #allocation0 [shape = 'u32[]', space=smem, size = 0x4, offset = 0x4, fixed_abs, tag = 'smem constant byte address 0x4 - core index']
  #allocation1 [shape = 'u32[144,128]{1,0:T(1,128)}', space=vmem, size = 0x12000, scoped, tag = 'internal scratch']
  #allocation2 [shape = 'f32[1,1]{1,0:T(1,128)S(1)}', space=vmem, size = 0x200, scoped, tag = 'scoped memory for tpu_custom_call.1']
  %s0 = inlined_call_operand.hbm [shape: f32[8,32], index: 0, kind: input, shape index: {}]
  %s1 = inlined_call_operand.hbm [shape: f32[32,64], index: 1, kind: input, shape index: {}]
  %s2 = inlined_call_operand.vmem [shape: f32[1,64], index: 2, kind: input, shape index: {}]
  %s3 = inlined_call_operand.vmem [shape: f32[1,64], index: 3, kind: input, shape index: {}]
  %s4 = inlined_call_operand.vmem [shape: f32[1,64], index: 4, kind: input, shape index: {}]
  %s5 = inlined_call_operand.hbm [shape: f32[64,64], index: 5, kind: input, shape index: {}]
  %s6 = inlined_call_operand.vmem [shape: f32[1,64], index: 6, kind: input, shape index: {}]
  %s7 = inlined_call_operand.vmem [shape: f32[1,64], index: 7, kind: input, shape index: {}]
  %s8 = inlined_call_operand.vmem [shape: f32[1,64], index: 8, kind: input, shape index: {}]
  %s9 = inlined_call_operand.vmem [shape: f32[1,64], index: 9, kind: input, shape index: {}]
  %s10 = inlined_call_operand.<no memory space> [shape: f32[1,1], index: 10, kind: input, shape index: {}]
  %s11 = inlined_call_operand.vmem [shape: f32[8,1], index: 11, kind: output, shape index: {}]
  %s12 = sld [smem:[#allocation0]]
  $region66: #{tpu_custom_call.1} parent=0
    _
  %s14 = ssub.s32 1, %s12
  %s15 = scalar_select 0, %s14, %s12
  %v16 = vstv %s10
  %17 = vst [vmem:[#allocation2] sm:$0x1] %v16
  $region1: #{tpu_custom_call.1} parent=0
    #allocation3 [shape = 'u8[4096]{0}', space=vmem, size = 0x1000, scoped, tag = 'input window, operand 0, single buffered']
    #allocation4 [shape = 's32[1]{0}', space=sflag, size = 0x4, scoped, tag = 'scoped memory for tpu_custom_call.1']
    #allocation5 [shape = 'u8[16384]{0}', space=vmem, size = 0x4000, scoped, tag = 'input window, operand 1, single buffered']
    #allocation6 [shape = 's32[1]{0}', space=sflag, size = 0x4, scoped, tag = 'scoped memory for tpu_custom_call.1']
    #allocation7 [shape = 'u8[32768]{0}', space=vmem, size = 0x8000, scoped, tag = 'input window, operand 5, single buffered']
    %18 = vsyncpa [#allocation4], 0
    %19 = vsyncpa [#allocation6], 0
    // Predicated region
    $region2: #{tpu_custom_call.1} parent=1 // pred_check
      _
    $region3: #{tpu_custom_call.1} parent=1 // pred_check_branch
      %21 = sbr.rel (0) target = $region5
    $region4: #{tpu_custom_call.1} parent=1 // pred_region
      %s23 = ssub.s32 128, 128
      %24 = vsyncadd [#allocation4], %s23
      %s26 = sshll.u32 [#allocation3], 4
      %s27 = int_to_ptr.vmem [resolvable:$true] %s26
      %29 = dma.hbm_to_vmem [thread:$0]  %s0, 128, %s27, [#allocation4]
    $region5: #{tpu_custom_call.1} parent=1 // pred_fallthru
      _
    // Predicated region
    $region6: #{tpu_custom_call.1} parent=1 // pred_check
      _
    $region7: #{tpu_custom_call.1} parent=1 // pred_check_branch
      %31 = sbr.rel (0) target = $region9
    $region8: #{tpu_custom_call.1} parent=1 // pred_region
      %s33 = ssub.s32 512, 512
      %34 = vsyncadd [#allocation6], %s33
      %s35 = sshll.u32 [#allocation5], 4
      %s36 = int_to_ptr.vmem [resolvable:$true] %s35
      %41 = dma.hbm_to_vmem [thread:$0]  %s1, 512, %s36, [#allocation6], 128, 128, 8
    $region9: #{tpu_custom_call.1} parent=1 // pred_fallthru
      _
    // Predicated region
    $region10: #{tpu_custom_call.1} parent=1 // pred_check
      _
    $region11: #{tpu_custom_call.1} parent=1 // pred_check_branch
      %43 = sbr.rel (0) target = $region13
    $region12: #{tpu_custom_call.1} parent=1 // pred_region
      _
    $region13: #{tpu_custom_call.1} parent=1 // pred_fallthru
      _
    // Predicated region
    $region14: #{tpu_custom_call.1} parent=1 // pred_check
      _
    $region15: #{tpu_custom_call.1} parent=1 // pred_check_branch
      %45 = sbr.rel (0) target = $region17
    $region16: #{tpu_custom_call.1} parent=1 // pred_region
      _
    $region17: #{tpu_custom_call.1} parent=1 // pred_fallthru
      _
    // Predicated region
    $region18: #{tpu_custom_call.1} parent=1 // pred_check
      _
    $region19: #{tpu_custom_call.1} parent=1 // pred_check_branch
      %47 = sbr.rel (0) target = $region21
    $region20: #{tpu_custom_call.1} parent=1 // pred_region
      _
    $region21: #{tpu_custom_call.1} parent=1 // pred_fallthru
      _
    // Predicated region
    $region22: #{tpu_custom_call.1} parent=1 // pred_check
      _
    $region23: #{tpu_custom_call.1} parent=1 // pred_check_branch
      %49 = sbr.rel (0) target = $region25
    $region24: #{tpu_custom_call.1} parent=1 // pred_region
      %s51 = ssub.s32 1024, 1024
      %52 = vsyncadd [#allocation6], %s51
      %s53 = sshll.u32 [#allocation7], 4
      %s54 = int_to_ptr.vmem [resolvable:$true] %s53
      %59 = dma.hbm_to_vmem [thread:$0]  %s5, 1024, %s54, [#allocation6], 128, 128, 8
    $region25: #{tpu_custom_call.1} parent=1 // pred_fallthru
      _
    // Predicated region
    $region26: #{tpu_custom_call.1} parent=1 // pred_check
      _
    $region27: #{tpu_custom_call.1} parent=1 // pred_check_branch
      %61 = sbr.rel (0) target = $region29
    $region28: #{tpu_custom_call.1} parent=1 // pred_region
      _
    $region29: #{tpu_custom_call.1} parent=1 // pred_fallthru
      _
    // Predicated region
    $region30: #{tpu_custom_call.1} parent=1 // pred_check
      _
    $region31: #{tpu_custom_call.1} parent=1 // pred_check_branch
      %63 = sbr.rel (0) target = $region33
    $region32: #{tpu_custom_call.1} parent=1 // pred_region
      _
    $region33: #{tpu_custom_call.1} parent=1 // pred_fallthru
      _
    // Predicated region
    $region34: #{tpu_custom_call.1} parent=1 // pred_check
      _
    $region35: #{tpu_custom_call.1} parent=1 // pred_check_branch
      %65 = sbr.rel (0) target = $region37
    $region36: #{tpu_custom_call.1} parent=1 // pred_region
      _
    $region37: #{tpu_custom_call.1} parent=1 // pred_fallthru
      _
    // Predicated region
    $region38: #{tpu_custom_call.1} parent=1 // pred_check
      _
    $region39: #{tpu_custom_call.1} parent=1 // pred_check_branch
      %67 = sbr.rel (0) target = $region41
    $region40: #{tpu_custom_call.1} parent=1 // pred_region
      _
    $region41: #{tpu_custom_call.1} parent=1 // pred_fallthru
      _
    // Predicated region
    $region42: #{tpu_custom_call.1} parent=1 // pred_check
      _
    $region43: #{tpu_custom_call.1} parent=1 // pred_check_branch
      %69 = sbr.rel (0) target = $region45
    $region44: #{tpu_custom_call.1} parent=1 // pred_region
      _
    $region45: #{tpu_custom_call.1} parent=1 // pred_fallthru
      _
    // Predicated region
    $region46: #{tpu_custom_call.1} parent=1 // pred_check
      _
    $region47: #{tpu_custom_call.1} parent=1 // pred_check_branch
      %71 = sbr.rel (0) target = $region49
    $region48: #{tpu_custom_call.1} parent=1 // pred_region
      %72 = dma.done [#allocation4], 128
    $region49: #{tpu_custom_call.1} parent=1 // pred_fallthru
      _
    // Predicated region
    $region50: #{tpu_custom_call.1} parent=1 // pred_check
      _
    $region51: #{tpu_custom_call.1} parent=1 // pred_check_branch
      %74 = sbr.rel (0) target = $region53
    $region52: #{tpu_custom_call.1} parent=1 // pred_region
      %75 = dma.done [#allocation6], 512
    $region53: #{tpu_custom_call.1} parent=1 // pred_fallthru
      _
    // Predicated region
    $region54: #{tpu_custom_call.1} parent=1 // pred_check
      _
    $region55: #{tpu_custom_call.1} parent=1 // pred_check_branch
      %77 = sbr.rel (0) target = $region57
    $region56: #{tpu_custom_call.1} parent=1 // pred_region
      %78 = dma.done [#allocation6], 1024
    $region57: #{tpu_custom_call.1} parent=1 // pred_fallthru
      _
    %v79 = vld [vmem:[#allocation3] sm:$0xff]
    %v80 = vld [vmem:[#allocation5] sm:$0xff]
    %v81 = vld [vmem:[#allocation5 + $0x8] sm:$0xff]
    %v82 = vld [vmem:[#allocation5 + $0x10] sm:$0xff]
    %v83 = vld [vmem:[#allocation5 + $0x18] sm:$0xff]
    %v84 = vld [vmem:[%s2] sm:$0x1]
    %v86 = vlaneseq
    %v87 = vshrl.u32 %v86, 7
    %v88 = vsub.s32 0, %v87
    %v89 = vrot.slane %v84, %v88
    %vm91 = vcmask 261120
    %v93 = vsel %vm91, %v79, 0
    %95 = vmatprep.subr.mxu0 0.0
    %96 = vmatpush1.msra.mxu0 %v80
    %97 = vmatprep.subr.mxu0 0.0
    %98 = vmatpush1.msra.mxu0 %v81
    %99 = vmatprep.subr.mxu0 0.0
    %100 = vmatpush1.msra.mxu0 %v82
    %101 = vmatprep.subr.mxu0 0.0
    %102 = vmatpush1.msra.mxu0 %v83
    %103 = vmatprep.subr.mxu0 0.0
    %104 = vmatpush1.msra.mxu0 0.0
    %105 = vmatprep.subr.mxu0 0.0
    %106 = vmatpush1.msra.mxu0 0.0
    %107 = vmatprep.subr.mxu0 0.0
    %108 = vmatpush1.msra.mxu0 0.0
    %109 = vmatprep.subr.mxu0 0.0
    %110 = vmatpush1.msra.mxu0 0.0
    %111 = vmatprep.subr.mxu0 0.0
    %112 = vmatpush1.msra.mxu0 0.0
    %113 = vmatprep.subr.mxu0 0.0
    %114 = vmatpush1.msra.mxu0 0.0
    %115 = vmatprep.subr.mxu0 0.0
    %116 = vmatpush1.msra.mxu0 0.0
    %117 = vmatprep.subr.mxu0 0.0
    %118 = vmatpush1.msra.mxu0 0.0
    %119 = vmatprep.subr.mxu0 0.0
    %120 = vmatpush1.msra.mxu0 0.0
    %121 = vmatprep.subr.mxu0 0.0
    %122 = vmatpush1.msra.mxu0 0.0
    %123 = vmatprep.subr.mxu0 0.0
    %124 = vmatpush1.msra.mxu0 0.0
    %125 = vmatprep.subr.mxu0 0.0
    %126 = vmatpush1.msra.mxu0 0.0
    %127 = vmatprep.subr.mxu0 0.0
    %128 = vmatpush1.msra.mxu0 0.0
    %129 = vmatprep.subr.mxu0 0.0
    %130 = vmatpush1.msra.mxu0 0.0
    %131 = vmatprep.subr.mxu0 0.0
    %132 = vmatpush1.msra.mxu0 0.0
    %133 = vmatprep.subr.mxu0 0.0
    %134 = vmatpush1.msra.mxu0 0.0
    %135 = vmatprep.subr.mxu0 0.0
    %136 = vmatpush1.msra.mxu0 0.0
    %137 = vmatprep.subr.mxu0 0.0
    %138 = vmatpush1.msra.mxu0 0.0
    %139 = vmatprep.subr.mxu0 0.0
    %140 = vmatpush1.msra.mxu0 0.0
    %141 = vmatprep.subr.mxu0 0.0
    %142 = vmatpush1.msra.mxu0 0.0
    %143 = vmatprep.subr.mxu0 0.0
    %144 = vmatpush1.msra.mxu0 0.0
    %145 = vmatprep.subr.mxu0 0.0
    %146 = vmatpush1.msra.mxu0 0.0
    %147 = vmatprep.subr.mxu0 0.0
    %148 = vmatpush1.msra.mxu0 0.0
    %149 = vmatprep.subr.mxu0 0.0
    %150 = vmatpush1.msra.mxu0 0.0
    %151 = vmatprep.subr.mxu0 0.0
    %152 = vmatpush1.msra.mxu0 0.0
    %153 = vmatprep.subr.mxu0 0.0
    %154 = vmatpush1.msra.mxu0 0.0
    %155 = vmatprep.subr.mxu0 0.0
    %156 = vmatpush1.msra.mxu0 0.0
    %157 = vmatprep.subr.mxu0 0.0
    %158 = vmatpush1.msra.mxu0 0.0
    %159 = vmatprep.mubr.f32.mxu0 0.0
    %160 = vmatmul.mubr.f32.gmra.mrb[0].mxu0 %v93
    %v161 = vpop.f32.mrb[0].mxu0
    %v162 = vadd.f32 %v89, %v161
    %v163 = vpop.f32.mrb[0].mxu0
    %164 = vdwg.mxu0
    %vm165 = vcmp.gt.f32.partialorder %v162, 0.0
    %v166 = vmin.f32 %v162, 0.0
    %v167 = vmul.f32 %v166, 1.442695
    %v168 = vpow.pop %v167
    %v169 = vsub.f32 %v168, 1.0
    %v170 = vsel %vm165, %v162, %v169
    %v171 = vld [vmem:[%s3] sm:$0x1]
    %v172 = vld [vmem:[%s4] sm:$0x1]
    %vm173 = vcmask 523264
    %v174 = vsel %vm173, %v170, 0.0
    %175 = vadd.xlane.f32.xlu0 %v174
    %v176 = vpop.xlane.xlu0 %175
    %v177 = vmul.f32 %v170, %v170
    %v178 = vsel %vm173, %v177, 0.0
    %179 = vadd.xlane.f32.xlu0 %v178
    %v180 = vpop.xlane.xlu0 %179
    %v181 = vmul.f32 %v176, 0.015625
    %v182 = vmul.f32 %v180, 0.015625
    %v183 = vmul.f32 %v181, %v181
    %v184 = vsub.f32 %v182, %v183
    %v185 = vsub.f32 %v170, %v181
    %v186 = vadd.f32 %v184, 1e-05
    %v187 = vrsqrt.pop %v186
    %v188 = vmul.f32 %v185, %v187
    %v190 = vlaneseq
    %v191 = vshrl.u32 %v190, 7
    %v192 = vsub.s32 0, %v191
    %v193 = vrot.slane %v171, %v192
    %v195 = vmul.f32 %v188, %v193
    %v197 = vlaneseq
    %v198 = vshrl.u32 %v197, 7
    %v199 = vsub.s32 0, %v198
    %v200 = vrot.slane %v172, %v199
    %v202 = vadd.f32 %v195, %v200
    %v203 = vld [vmem:[#allocation7] sm:$0xff]
    %v204 = vld [vmem:[#allocation7 + $0x8] sm:$0xff]
    %v205 = vld [vmem:[#allocation7 + $0x10] sm:$0xff]
    %v206 = vld [vmem:[#allocation7 + $0x18] sm:$0xff]
    %v207 = vld [vmem:[#allocation7 + $0x20] sm:$0xff]
    %v208 = vld [vmem:[#allocation7 + $0x28] sm:$0xff]
    %v209 = vld [vmem:[#allocation7 + $0x30] sm:$0xff]
    %v210 = vld [vmem:[#allocation7 + $0x38] sm:$0xff]
    %v211 = vld [vmem:[%s6] sm:$0x1]
    %v213 = vlaneseq
    %v214 = vshrl.u32 %v213, 7
    %v215 = vsub.s32 0, %v214
    %v216 = vrot.slane %v211, %v215
    %v219 = vsel %vm173, %v202, 0
    %221 = vmatprep.subr.mxu0 0.0
    %222 = vmatpush1.msra.mxu0 %v203
    %223 = vmatprep.subr.mxu0 0.0
    %224 = vmatpush1.msra.mxu0 %v204
    %225 = vmatprep.subr.mxu0 0.0
    %226 = vmatpush1.msra.mxu0 %v205
    %227 = vmatprep.subr.mxu0 0.0
    %228 = vmatpush1.msra.mxu0 %v206
    %229 = vmatprep.subr.mxu0 0.0
    %230 = vmatpush1.msra.mxu0 %v207
    %231 = vmatprep.subr.mxu0 0.0
    %232 = vmatpush1.msra.mxu0 %v208
    %233 = vmatprep.subr.mxu0 0.0
    %234 = vmatpush1.msra.mxu0 %v209
    %235 = vmatprep.subr.mxu0 0.0
    %236 = vmatpush1.msra.mxu0 %v210
    %237 = vmatprep.subr.mxu0 0.0
    %238 = vmatpush1.msra.mxu0 0.0
    %239 = vmatprep.subr.mxu0 0.0
    %240 = vmatpush1.msra.mxu0 0.0
    %241 = vmatprep.subr.mxu0 0.0
    %242 = vmatpush1.msra.mxu0 0.0
    %243 = vmatprep.subr.mxu0 0.0
    %244 = vmatpush1.msra.mxu0 0.0
    %245 = vmatprep.subr.mxu0 0.0
    %246 = vmatpush1.msra.mxu0 0.0
    %247 = vmatprep.subr.mxu0 0.0
    %248 = vmatpush1.msra.mxu0 0.0
    %249 = vmatprep.subr.mxu0 0.0
    %250 = vmatpush1.msra.mxu0 0.0
    %251 = vmatprep.subr.mxu0 0.0
    %252 = vmatpush1.msra.mxu0 0.0
    %253 = vmatprep.subr.mxu0 0.0
    %254 = vmatpush1.msra.mxu0 0.0
    %255 = vmatprep.subr.mxu0 0.0
    %256 = vmatpush1.msra.mxu0 0.0
    %257 = vmatprep.subr.mxu0 0.0
    %258 = vmatpush1.msra.mxu0 0.0
    %259 = vmatprep.subr.mxu0 0.0
    %260 = vmatpush1.msra.mxu0 0.0
    %261 = vmatprep.subr.mxu0 0.0
    %262 = vmatpush1.msra.mxu0 0.0
    %263 = vmatprep.subr.mxu0 0.0
    %264 = vmatpush1.msra.mxu0 0.0
    %265 = vmatprep.subr.mxu0 0.0
    %266 = vmatpush1.msra.mxu0 0.0
    %267 = vmatprep.subr.mxu0 0.0
    %268 = vmatpush1.msra.mxu0 0.0
    %269 = vmatprep.subr.mxu0 0.0
    %270 = vmatpush1.msra.mxu0 0.0
    %271 = vmatprep.subr.mxu0 0.0
    %272 = vmatpush1.msra.mxu0 0.0
    %273 = vmatprep.subr.mxu0 0.0
    %274 = vmatpush1.msra.mxu0 0.0
    %275 = vmatprep.subr.mxu0 0.0
    %276 = vmatpush1.msra.mxu0 0.0
    %277 = vmatprep.subr.mxu0 0.0
    %278 = vmatpush1.msra.mxu0 0.0
    %279 = vmatprep.subr.mxu0 0.0
    %280 = vmatpush1.msra.mxu0 0.0
    %281 = vmatprep.subr.mxu0 0.0
    %282 = vmatpush1.msra.mxu0 0.0
    %283 = vmatprep.subr.mxu0 0.0
    %284 = vmatpush1.msra.mxu0 0.0
    %285 = vmatprep.mubr.f32.mxu0 0.0
    %286 = vmatmul.mubr.f32.gmra.mrb[0].mxu0 %v219
    %v287 = vpop.f32.mrb[0].mxu0
    %v288 = vadd.f32 %v216, %v287
    %v289 = vpop.f32.mrb[0].mxu0
    %290 = vdwg.mxu0
    %vm291 = vcmp.gt.f32.partialorder %v288, 0.0
    %v292 = vmin.f32 %v288, 0.0
    %v293 = vmul.f32 %v292, 1.442695
    %v294 = vpow.pop %v293
    %v295 = vsub.f32 %v294, 1.0
    %v296 = vsel %vm291, %v288, %v295
    %v297 = vld [vmem:[%s7] sm:$0x1]
    %v298 = vld [vmem:[%s8] sm:$0x1]
    %v299 = vsel %vm173, %v296, 0.0
    %300 = vadd.xlane.f32.xlu0 %v299
    %v301 = vpop.xlane.xlu0 %300
    %v302 = vmul.f32 %v296, %v296
    %v303 = vsel %vm173, %v302, 0.0
    %304 = vadd.xlane.f32.xlu0 %v303
    %v305 = vpop.xlane.xlu0 %304
    %v306 = vmul.f32 %v301, 0.015625
    %v307 = vmul.f32 %v305, 0.015625
    %v308 = vmul.f32 %v306, %v306
    %v309 = vsub.f32 %v307, %v308
    %v310 = vsub.f32 %v296, %v306
    %v311 = vadd.f32 %v309, 1e-05
    %v312 = vrsqrt.pop %v311
    %v313 = vmul.f32 %v310, %v312
    %v315 = vlaneseq
    %v316 = vshrl.u32 %v315, 7
    %v317 = vsub.s32 0, %v316
    %v318 = vrot.slane %v297, %v317
    %v320 = vmul.f32 %v313, %v318
    %v322 = vlaneseq
    %v323 = vshrl.u32 %v322, 7
    %v324 = vsub.s32 0, %v323
    %v325 = vrot.slane %v298, %v324
    %v327 = vadd.f32 %v320, %v325
    %v328 = vld [vmem:[%s9] sm:$0x1]
    %v330 = vlaneseq
    %v331 = vshrl.u32 %v330, 7
    %v332 = vsub.s32 0, %v331
    %v333 = vrot.slane %v328, %v332
    %v335 = vmul.f32 %v327, %v333
    %v336 = vsel %vm173, %v335, 0.0
    %337 = vadd.xlane.f32.xlu0 %v336
    %v338 = vpop.xlane.xlu0 %337
    %v339 = vld [vmem:[#allocation2] sm:$0x1]
    %v341 = vlaneseq
    %v342 = vshrl.u32 %v341, 7
    %v343 = vsub.s32 0, %v342
    %v344 = vrot.slane %v339, %v343
    %v346 = vadd.f32 %v338, %v344
    %vm347 = vcmask 7168
    %348 = vst.msk [vmem:[%s11] sm:$0xff] %vm347, %v346
    // Predicated region
    $region58: #{tpu_custom_call.1} parent=1 // pred_check
      _
    $region59: #{tpu_custom_call.1} parent=1 // pred_check_branch
      %350 = sbr.rel (0) target = $region61
    $region60: #{tpu_custom_call.1} parent=1 // pred_region
      _
    $region61: #{tpu_custom_call.1} parent=1 // pred_fallthru
      _
    // Predicated region
    $region62: #{tpu_custom_call.1} parent=1 // pred_check
      _
    $region63: #{tpu_custom_call.1} parent=1 // pred_check_branch
      %352 = sbr.rel (0) target = $region65
    $region64: #{tpu_custom_call.1} parent=1 // pred_region
      _
    $region65: #{tpu_custom_call.1} parent=1 // pred_fallthru
      _
    %353 = vsyncpa [#allocation4], 1
    %354 = vsyncpa [#allocation6], 1

</llo_original>
